<compile_context>
chip_gen: v5e
topology: v5e:2x2
jax: 0.10.0
libtpu: 0.0.40
codegen_flags: <defaults>
</compile_context>

<pallas_src>
import numpy as np
import jax
import jax.numpy as jnp
from jax.experimental import pallas as pl
from jax.experimental.pallas import tpu as pltpu


# ------------------------------ config --------------------------------------
BATCH = 8
FIELD_NUM = 4        # fields per example (F)
LATENT_DIM = 16      # embedding dim (D)
FEATURE_NUM = 32     # vocabulary size (V)
MLP_DIMS = (32, 16)  # hidden dims of the DNN tower (H1, H2)
MASK_INITIAL = 0.0   # opt['mask_initial']
TEMP = 1.0           # self.temp
# dropout is an eval-mode no-op; use_bn=False for this synthetic config.

MXU_DTYPE = jnp.bfloat16   # MXU operand dtype (accumulation & VPU math stay f32)
MAX_BATCH_TILE = 1024      # rows per grid step; sweep 1024-4096 on real batches
MIN_SPLIT_TILE = 256       # only split the batch into >=2 grid steps (two v7x
                           # TensorCores) once each tile is at least this big


def _np_sigmoid(v):
    return float(1.0 / (1.0 + np.exp(-v)))


# ------------------------------ kernel ---------------------------------------
def _make_kernel(Bt, F, V, D, H1, H2, lane_dense_out):
    del V  # only used for shapes below via closure of F*V lanes

    def kernel(idx_ref, gtable_ref, w1s_ref, w2_ref, wout_ref, bias_ref, o_ref):
        idx = idx_ref[...]                                    # (Bt, F) int32

        # ---- one-hot (Bt, F*V): one compare per field, OR-accumulated ------
        col = jax.lax.broadcasted_iota(jnp.int32, (Bt, F * FEATURE_NUM), 1)
        hit = col == idx[:, 0:1]
        for f in range(1, F):                                 # F static, tiny
            hit = hit | (col == idx[:, f:f + 1] + f * FEATURE_NUM)
        onehot = hit.astype(jnp.float32).astype(MXU_DTYPE)    # 0/1 exact in bf16

        # ---- gather the pre-masked embedding in DNN layout: one MXU push ---
        xe = jnp.dot(onehot, gtable_ref[...],
                     preferred_element_type=jnp.float32)      # (Bt, F*D)

        # ---- first dense layer + FM field-sum fused into one matmul --------
        h1s = jnp.dot(xe.astype(MXU_DTYPE), w1s_ref[...],
                      preferred_element_type=jnp.float32)     # (Bt, H1 + D)
        h1 = jnp.maximum(h1s[:, :H1] + bias_ref[:, :H1], 0.0)  # (Bt, H1)
        s = h1s[:, H1:]                                       # sum_f xe (Bt, D)

        # FM second-order term: 0.5 * sum_d[(sum_f xe)^2 - sum_f xe^2]
        fm = 0.5 * (jnp.sum(s * s, axis=-1, keepdims=True)
                    - jnp.sum(xe * xe, axis=-1, keepdims=True))  # (Bt, 1)

        # ---- remaining MLP layers (ReLU; eval-mode dropout = no-op) --------
        h2 = jnp.maximum(
            jnp.dot(h1.astype(MXU_DTYPE), w2_ref[...],
                    preferred_element_type=jnp.float32)
            + bias_ref[:, H1:H1 + H2], 0.0)                   # (Bt, H2)
        # final H2 -> 1 layer on the VPU/XLU (avoid an N=1 MXU push)
        out_dnn = (jnp.sum(h2 * wout_ref[...], axis=-1, keepdims=True)
                   + bias_ref[:, H1 + H2:H1 + H2 + 1])        # (Bt, 1)

        logit = out_dnn + fm                                  # (Bt, 1)
        if lane_dense_out:
            # lane-dense store: small XLU relayout, unmasked vst + dense DMA
            o_ref[...] = logit.reshape(1, Bt)
        else:
            o_ref[...] = logit

    return kernel


# ------------------------------ wrapper ---------------------------------------
def mask_deepfm_forward(x_idx, params, *, temp=TEMP, mask_initial=MASK_INITIAL):
    """x_idx: (B, F) int32 feature ids in [0, V). Returns logits (B, 1) f32."""
    B, F = x_idx.shape
    V, D = params["embedding"].shape
    H1 = params["w1"].shape[1]
    H2 = params["w2"].shape[1]
    FD = F * D
    f32 = jnp.float32

    # ---- eval-mode constant folds (wrapper side, O(V*D)) ---------------------
    # The mask depends only on the vocab id -> fold it into the gather table.
    # (Only valid for frozen mask weights, i.e. exactly this eval forward; do
    #  NOT reuse for a training / ticket-mask variant.)
    scaling = 1.0 / _np_sigmoid(mask_initial)
    mask_col = scaling * jax.nn.sigmoid(temp * params["mask_weight"].astype(f32))
    masked_emb = params["embedding"].astype(f32) * mask_col              # (V, D)
    # Block-diagonal gather table: one-hot @ gtable == masked embedding in the
    # (B, F*D) DNN layout.
    gtable = jnp.kron(jnp.eye(F, dtype=f32), masked_emb).astype(MXU_DTYPE)
    # TODO(synk): for production vocab sizes (V >> a few thousand) the one-hot
    # gather / resident gtable stops fitting VMEM (v7x 64 MiB/TC first); switch
    # to PrefetchScalarGridSpec with x_idx scalar-prefetched and a per-row DMA
    # gather of the F embedding rows.

    # [W1 | S]: S sums the F field blocks of x_dnn -> folds the FM field-sum
    # into the first-layer matmul.
    S = jnp.kron(jnp.ones((F, 1), f32), jnp.eye(D, dtype=f32))           # (F*D, D)
    w1s = jnp.concatenate([params["w1"].astype(f32), S],
                          axis=1).astype(MXU_DTYPE)                      # (F*D, H1+D)
    w2 = params["w2"].astype(MXU_DTYPE)                                  # (H1, H2)
    wout_row = params["wout"].astype(f32).reshape(1, H2)                 # (1, H2)
    biases = jnp.concatenate(
        [params["b1"].reshape(1, H1).astype(f32),
         params["b2"].reshape(1, H2).astype(f32),
         params["bout"].reshape(1, 1).astype(f32)], axis=1)              # (1, H1+H2+1)

    # ---- batch tiling --------------------------------------------------------
    # Weights are VMEM-resident, so per-step VMEM only grows with the (bt, F*V)
    # one-hot / activations; a large tile amortizes the ~0.35 us per-step cost.
    if B > MAX_BATCH_TILE:
        bt = MAX_BATCH_TILE
    elif B >= 2 * MIN_SPLIT_TILE:
        bt = -(-B // 2)            # >=2 grid steps so both v7x TensorCores work
    else:
        bt = B
    bt = max(8, -(-bt // 8) * 8)   # sublane-align the batch tile
    n_tiles = -(-B // bt)
    b_pad = n_tiles * bt
    idx = x_idx.astype(jnp.int32)
    if b_pad != B:
        idx = jnp.pad(idx, ((0, b_pad - B), (0, 0)))   # padded rows sliced off

    def build(optimized):
        kernel = _make_kernel(bt, F, V, D, H1, H2, lane_dense_out=optimized)

        def resident(shape):
            # Constant-index weights never change across grid steps; single-
            # buffer them to save VMEM (matters once V / gtable grows).
            if optimized:
                return pl.BlockSpec(shape, lambda i: (0, 0),
                                    pipeline_mode=pl.Buffered(1))
            return pl.BlockSpec(shape, lambda i: (0, 0))

        if optimized:
            out_shape = jax.ShapeDtypeStruct((n_tiles, bt), jnp.float32)
            out_spec = pl.BlockSpec((1, bt), lambda i: (i, 0))   # lane-dense
        else:
            out_shape = jax.ShapeDtypeStruct((b_pad, 1), jnp.float32)
            out_spec = pl.BlockSpec((bt, 1), lambda i: (i, 0))

        return pl.pallas_call(
            kernel,
            out_shape=out_shape,
            grid=(n_tiles,),
            in_specs=[
                pl.BlockSpec((bt, F), lambda i: (i, 0)),    # feature ids
                resident((F * V, FD)),                      # masked gather table
                resident((FD, H1 + D)),                     # [W1 | S]
                resident((H1, H2)),                         # W2
                resident((1, H2)),                          # Wout row
                resident((1, H1 + H2 + 1)),                 # packed biases
            ],
            out_specs=out_spec,
            compiler_params=pltpu.CompilerParams(
                dimension_semantics=("parallel",)),         # 2 TCs on v7x
        )

    args = (idx, gtable, w1s, w2, wout_row, biases)
    try:
        out = jax.block_until_ready(build(True)(*args))      # optimized path
        out = out.reshape(b_pad, 1)
    except Exception:  # noqa: BLE001 — pure-optimization features unsupported
        # Conservative fallback (column output, default double-buffered
        # weights) for toolchains lacking pl.Buffered(1) or the in-kernel
        # (bt,1)->(1,bt) relayout.  Same math, same results.
        out = build(False)(*args)

    return out[:B]


# --------------------------- parameter init ----------------------------------
def init_params(key):
    ks = jax.random.split(key, 8)
    dnn_dim = FIELD_NUM * LATENT_DIM
    H1, H2 = MLP_DIMS

    # MaskEmbedding: xavier_uniform embedding, mask_weight = mask_initial const
    xav = np.sqrt(6.0 / (FEATURE_NUM + LATENT_DIM))
    embedding = jax.random.uniform(ks[0], (FEATURE_NUM, LATENT_DIM),
                                   minval=-xav, maxval=xav, dtype=jnp.float32)
    mask_weight = jnp.full((FEATURE_NUM, 1), MASK_INITIAL, dtype=jnp.float32)

    def linear(k, fan_in, fan_out):
        kw, kb = jax.random.split(k)
        bound = 1.0 / np.sqrt(fan_in)
        w = jax.random.uniform(kw, (fan_in, fan_out),
                               minval=-bound, maxval=bound, dtype=jnp.float32)
        b = jax.random.uniform(kb, (fan_out,),
                               minval=-bound, maxval=bound, dtype=jnp.float32)
        return w, b

    w1, b1 = linear(ks[1], dnn_dim, H1)
    w2, b2 = linear(ks[2], H1, H2)
    wout, bout = linear(ks[3], H2, 1)

    return dict(embedding=embedding, mask_weight=mask_weight,
                w1=w1, b1=b1, w2=w2, b2=b2, wout=wout, bout=bout)


# --------------------------- pure-JAX reference -------------------------------
def reference_forward(x_idx, params, *, temp=TEMP, mask_initial=MASK_INITIAL):
    B, F = x_idx.shape
    D = params["embedding"].shape[1]
    scaling = 1.0 / _np_sigmoid(mask_initial)

    embed = params["embedding"][x_idx]                                    # (B, F, D)
    mask = scaling * jax.nn.sigmoid(temp * params["mask_weight"][x_idx])  # (B, F, 1)
    xe = embed * mask

    s = jnp.sum(xe, axis=1)
    sq = jnp.sum(xe * xe, axis=1)
    fm = 0.5 * jnp.sum(s * s - sq, axis=1, keepdims=True)                 # (B, 1)

    x_dnn = xe.reshape(B, F * D)
    h = jax.nn.relu(x_dnn @ params["w1"] + params["b1"])
    h = jax.nn.relu(h @ params["w2"] + params["b2"])
    out_dnn = h @ params["wout"] + params["bout"]
    return out_dnn + fm


# ------------------------------- main -----------------------------------------
if __name__ == "__main__":
    key = jax.random.PRNGKey(0)
    k_params, k_idx = jax.random.split(key)

    params = init_params(k_params)
    x = jax.random.randint(k_idx, (BATCH, FIELD_NUM), 0, FEATURE_NUM,
                           dtype=jnp.int32)

    out = mask_deepfm_forward(x, params)
    out = jax.block_until_ready(out)

    ref = reference_forward(x, params)
    # bf16 MXU operands (f32 accumulation) vs the exact-f32 reference:
    # loosen tolerance from 1e-4 to 2e-2 per review.
    np.testing.assert_allclose(np.asarray(out), np.asarray(ref),
                               rtol=2e-2, atol=2e-2)

    print("KERNEL_OK")
</pallas_src>

<mosaic_0001>
module attributes {stable_mosaic.version = 11 : i64} {
  func.func @kernel(%arg0: i32, %arg1: memref<8x4xi32, #tpu.memory_space<vmem>>, %arg2: memref<128x64xbf16, #tpu.memory_space<vmem>>, %arg3: memref<64x48xbf16, #tpu.memory_space<vmem>>, %arg4: memref<32x16xbf16, #tpu.memory_space<vmem>>, %arg5: memref<1x16xf32, #tpu.memory_space<vmem>>, %arg6: memref<1x49xf32, #tpu.memory_space<vmem>>, %arg7: memref<1x8xf32, #tpu.memory_space<vmem>>) attributes {dimension_semantics = [#tpu.dimension_semantics<parallel>], iteration_bounds = array<i64: 1>, scalar_prefetch = 0 : i64, scratch_operands = 0 : i64, tpu.core_type = #tpu.core_type<tc>, window_params = [{transform_indices = @transform_0, window_bounds = array<i64: 8, 4>}, {pipeline_mode = #tpu.pipeline_mode<synchronous>, transform_indices = @transform_1, window_bounds = array<i64: 128, 64>}, {pipeline_mode = #tpu.pipeline_mode<synchronous>, transform_indices = @transform_2, window_bounds = array<i64: 64, 48>}, {pipeline_mode = #tpu.pipeline_mode<synchronous>, transform_indices = @transform_3, window_bounds = array<i64: 32, 16>}, {pipeline_mode = #tpu.pipeline_mode<synchronous>, transform_indices = @transform_4, window_bounds = array<i64: 1, 16>}, {pipeline_mode = #tpu.pipeline_mode<synchronous>, transform_indices = @transform_5, window_bounds = array<i64: 1, 49>}, {transform_indices = @transform_6, window_bounds = array<i64: 1, 8>}]} {
    %c0 = arith.constant 0 : index
    %c0_0 = arith.constant 0 : index
    %0 = vector.load %arg1[%c0, %c0_0] : memref<8x4xi32, #tpu.memory_space<vmem>>, vector<8x4xi32>
    %1 = tpu.iota {dimensions = array<i32: 1>} : vector<8x128xi32>
    %2 = vector.extract_strided_slice %0 {offsets = [0, 0], sizes = [8, 1], strides = [1, 1]} : vector<8x4xi32> to vector<8x1xi32>
    %3 = vector.broadcast %2 : vector<8x1xi32> to vector<8x128xi32>
    %4 = arith.cmpi eq, %1, %3 : vector<8x128xi32>
    %5 = vector.extract_strided_slice %0 {offsets = [0, 1], sizes = [8, 1], strides = [1, 1]} : vector<8x4xi32> to vector<8x1xi32>
    %c32_i32 = arith.constant 32 : i32
    %6 = vector.broadcast %c32_i32 : i32 to vector<8x1xi32>
    %7 = arith.addi %5, %6 : vector<8x1xi32>
    %8 = vector.broadcast %7 : vector<8x1xi32> to vector<8x128xi32>
    %9 = arith.cmpi eq, %1, %8 : vector<8x128xi32>
    %10 = arith.ori %4, %9 : vector<8x128xi1>
    %11 = vector.extract_strided_slice %0 {offsets = [0, 2], sizes = [8, 1], strides = [1, 1]} : vector<8x4xi32> to vector<8x1xi32>
    %c64_i32 = arith.constant 64 : i32
    %12 = vector.broadcast %c64_i32 : i32 to vector<8x1xi32>
    %13 = arith.addi %11, %12 : vector<8x1xi32>
    %14 = vector.broadcast %13 : vector<8x1xi32> to vector<8x128xi32>
    %15 = arith.cmpi eq, %1, %14 : vector<8x128xi32>
    %16 = arith.ori %10, %15 : vector<8x128xi1>
    %17 = vector.extract_strided_slice %0 {offsets = [0, 3], sizes = [8, 1], strides = [1, 1]} : vector<8x4xi32> to vector<8x1xi32>
    %c96_i32 = arith.constant 96 : i32
    %18 = vector.broadcast %c96_i32 : i32 to vector<8x1xi32>
    %19 = arith.addi %17, %18 : vector<8x1xi32>
    %20 = vector.broadcast %19 : vector<8x1xi32> to vector<8x128xi32>
    %21 = arith.cmpi eq, %1, %20 : vector<8x128xi32>
    %22 = arith.ori %16, %21 : vector<8x128xi1>
    %23 = arith.extui %22 : vector<8x128xi1> to vector<8x128xi32>
    %24 = arith.sitofp %23 : vector<8x128xi32> to vector<8x128xf32>
    %25 = arith.truncf %24 : vector<8x128xf32> to vector<8x128xbf16>
    %c0_1 = arith.constant 0 : index
    %c0_2 = arith.constant 0 : index
    %26 = vector.load %arg2[%c0_1, %c0_2] : memref<128x64xbf16, #tpu.memory_space<vmem>>, vector<128x64xbf16>
    %cst = arith.constant dense<0.000000e+00> : vector<8x64xf32>
    %27 = tpu.matmul %25, %26, %cst {dimension_numbers = #tpu.dot_dimension_numbers<[1], [0], [0], [1], [0, 0, 1, 1], [], []>} : vector<8x128xbf16>, vector<128x64xbf16>, vector<8x64xf32> -> vector<8x64xf32>
    %28 = arith.truncf %27 : vector<8x64xf32> to vector<8x64xbf16>
    %c0_3 = arith.constant 0 : index
    %c0_4 = arith.constant 0 : index
    %29 = vector.load %arg3[%c0_3, %c0_4] : memref<64x48xbf16, #tpu.memory_space<vmem>>, vector<64x48xbf16>
    %cst_5 = arith.constant dense<0.000000e+00> : vector<8x48xf32>
    %30 = tpu.matmul %28, %29, %cst_5 {dimension_numbers = #tpu.dot_dimension_numbers<[1], [0], [0], [1], [0, 0, 1, 1], [], []>} : vector<8x64xbf16>, vector<64x48xbf16>, vector<8x48xf32> -> vector<8x48xf32>
    %31 = vector.extract_strided_slice %30 {offsets = [0, 0], sizes = [8, 32], strides = [1, 1]} : vector<8x48xf32> to vector<8x32xf32>
    %c0_6 = arith.constant 0 : index
    %c0_7 = arith.constant 0 : index
    %32 = vector.load %arg6[%c0_6, %c0_7] : memref<1x49xf32, #tpu.memory_space<vmem>>, vector<1x32xf32>
    %33 = vector.broadcast %32 : vector<1x32xf32> to vector<8x32xf32>
    %34 = arith.addf %31, %33 : vector<8x32xf32>
    %cst_8 = arith.constant 0.000000e+00 : f32
    %35 = vector.broadcast %cst_8 : f32 to vector<8x32xf32>
    %36 = arith.maximumf %34, %35 : vector<8x32xf32>
    %37 = vector.extract_strided_slice %30 {offsets = [0, 32], sizes = [8, 16], strides = [1, 1]} : vector<8x48xf32> to vector<8x16xf32>
    %38 = arith.mulf %37, %37 : vector<8x16xf32>
    %cst_9 = arith.constant dense<0.000000e+00> : vector<8xf32>
    %39 = vector.multi_reduction <add>, %38, %cst_9 [1] : vector<8x16xf32> to vector<8xf32>
    %40 = vector.shape_cast %39 : vector<8xf32> to vector<8x1xf32>
    %41 = arith.mulf %27, %27 : vector<8x64xf32>
    %cst_10 = arith.constant dense<0.000000e+00> : vector<8xf32>
    %42 = vector.multi_reduction <add>, %41, %cst_10 [1] : vector<8x64xf32> to vector<8xf32>
    %43 = vector.shape_cast %42 : vector<8xf32> to vector<8x1xf32>
    %44 = arith.subf %40, %43 : vector<8x1xf32>
    %cst_11 = arith.constant 5.000000e-01 : f32
    %45 = vector.broadcast %cst_11 : f32 to vector<8x1xf32>
    %46 = arith.mulf %45, %44 : vector<8x1xf32>
    %47 = arith.truncf %36 : vector<8x32xf32> to vector<8x32xbf16>
    %c0_12 = arith.constant 0 : index
    %c0_13 = arith.constant 0 : index
    %48 = vector.load %arg4[%c0_12, %c0_13] : memref<32x16xbf16, #tpu.memory_space<vmem>>, vector<32x16xbf16>
    %cst_14 = arith.constant dense<0.000000e+00> : vector<8x16xf32>
    %49 = tpu.matmul %47, %48, %cst_14 {dimension_numbers = #tpu.dot_dimension_numbers<[1], [0], [0], [1], [0, 0, 1, 1], [], []>} : vector<8x32xbf16>, vector<32x16xbf16>, vector<8x16xf32> -> vector<8x16xf32>
    %c0_15 = arith.constant 0 : index
    %c32 = arith.constant 32 : index
    %50 = vector.load %arg6[%c0_15, %c32] : memref<1x49xf32, #tpu.memory_space<vmem>>, vector<1x16xf32>
    %51 = vector.broadcast %50 : vector<1x16xf32> to vector<8x16xf32>
    %52 = arith.addf %49, %51 : vector<8x16xf32>
    %cst_16 = arith.constant 0.000000e+00 : f32
    %53 = vector.broadcast %cst_16 : f32 to vector<8x16xf32>
    %54 = arith.maximumf %52, %53 : vector<8x16xf32>
    %c0_17 = arith.constant 0 : index
    %c0_18 = arith.constant 0 : index
    %55 = vector.load %arg5[%c0_17, %c0_18] : memref<1x16xf32, #tpu.memory_space<vmem>>, vector<1x16xf32>
    %56 = vector.broadcast %55 : vector<1x16xf32> to vector<8x16xf32>
    %57 = arith.mulf %54, %56 : vector<8x16xf32>
    %cst_19 = arith.constant dense<0.000000e+00> : vector<8xf32>
    %58 = vector.multi_reduction <add>, %57, %cst_19 [1] : vector<8x16xf32> to vector<8xf32>
    %59 = vector.shape_cast %58 : vector<8xf32> to vector<8x1xf32>
    %c0_20 = arith.constant 0 : index
    %c48 = arith.constant 48 : index
    %60 = vector.load %arg6[%c0_20, %c48] : memref<1x49xf32, #tpu.memory_space<vmem>>, vector<1x1xf32>
    %61 = vector.broadcast %60 : vector<1x1xf32> to vector<8x1xf32>
    %62 = arith.addf %59, %61 : vector<8x1xf32>
    %63 = arith.addf %62, %46 : vector<8x1xf32>
    %64 = vector.shape_cast %63 : vector<8x1xf32> to vector<1x8xf32>
    %c0_21 = arith.constant 0 : index
    %c0_22 = arith.constant 0 : index
    %65 = vector.load %arg7[%c0_21, %c0_22] : memref<1x8xf32, #tpu.memory_space<vmem>>, vector<1x8xf32>
    tpu.vector_store %arg7[%c0_21, %c0_22], %64 {strides = array<i32>} : memref<1x8xf32, #tpu.memory_space<vmem>>, vector<1x8xf32>,
    return
  }
  func.func @transform_0(%arg0: i32) -> (i32, i32) {
    %c0_i32 = arith.constant 0 : i32
    %c0_i32_0 = arith.constant 0 : i32
    return %arg0, %c0_i32 : i32, i32
  }
  func.func @transform_1(%arg0: i32) -> (i32, i32) {
    %c0_i32 = arith.constant 0 : i32
    %c0_i32_0 = arith.constant 0 : i32
    %c0_i32_1 = arith.constant 0 : i32
    return %c0_i32, %c0_i32_0 : i32, i32
  }
  func.func @transform_2(%arg0: i32) -> (i32, i32) {
    %c0_i32 = arith.constant 0 : i32
    %c0_i32_0 = arith.constant 0 : i32
    %c0_i32_1 = arith.constant 0 : i32
    return %c0_i32, %c0_i32_0 : i32, i32
  }
  func.func @transform_3(%arg0: i32) -> (i32, i32) {
    %c0_i32 = arith.constant 0 : i32
    %c0_i32_0 = arith.constant 0 : i32
    %c0_i32_1 = arith.constant 0 : i32
    return %c0_i32, %c0_i32_0 : i32, i32
  }
  func.func @transform_4(%arg0: i32) -> (i32, i32) {
    %c0_i32 = arith.constant 0 : i32
    %c0_i32_0 = arith.constant 0 : i32
    %c0_i32_1 = arith.constant 0 : i32
    return %c0_i32, %c0_i32_0 : i32, i32
  }
  func.func @transform_5(%arg0: i32) -> (i32, i32) {
    %c0_i32 = arith.constant 0 : i32
    %c0_i32_0 = arith.constant 0 : i32
    %c0_i32_1 = arith.constant 0 : i32
    return %c0_i32, %c0_i32_0 : i32, i32
  }
  func.func @transform_6(%arg0: i32) -> (i32, i32) {
    %c0_i32 = arith.constant 0 : i32
    %c0_i32_0 = arith.constant 0 : i32
    return %arg0, %c0_i32 : i32, i32
  }
}

module attributes {stable_mosaic.version = 11 : i64} {
  func.func @kernel(%arg0: i32, %arg1: memref<8x4xi32, #tpu.memory_space<vmem>>, %arg2: memref<128x64xbf16, #tpu.memory_space<vmem>>, %arg3: memref<64x48xbf16, #tpu.memory_space<vmem>>, %arg4: memref<32x16xbf16, #tpu.memory_space<vmem>>, %arg5: memref<1x16xf32, #tpu.memory_space<vmem>>, %arg6: memref<1x49xf32, #tpu.memory_space<vmem>>, %arg7: memref<8x1xf32, #tpu.memory_space<vmem>>) attributes {dimension_semantics = [#tpu.dimension_semantics<parallel>], iteration_bounds = array<i64: 1>, scalar_prefetch = 0 : i64, scratch_operands = 0 : i64, tpu.core_type = #tpu.core_type<tc>, window_params = [{transform_indices = @transform_0, window_bounds = array<i64: 8, 4>}, {pipeline_mode = #tpu.pipeline_mode<synchronous>, transform_indices = @transform_1, window_bounds = array<i64: 128, 64>}, {pipeline_mode = #tpu.pipeline_mode<synchronous>, transform_indices = @transform_2, window_bounds = array<i64: 64, 48>}, {pipeline_mode = #tpu.pipeline_mode<synchronous>, transform_indices = @transform_3, window_bounds = array<i64: 32, 16>}, {pipeline_mode = #tpu.pipeline_mode<synchronous>, transform_indices = @transform_4, window_bounds = array<i64: 1, 16>}, {pipeline_mode = #tpu.pipeline_mode<synchronous>, transform_indices = @transform_5, window_bounds = array<i64: 1, 49>}, {transform_indices = @transform_6, window_bounds = array<i64: 8, 1>}]} {
    %c0 = arith.constant 0 : index
    %c0_0 = arith.constant 0 : index
    %0 = vector.load %arg1[%c0, %c0_0] : memref<8x4xi32, #tpu.memory_space<vmem>>, vector<8x4xi32>
    %1 = tpu.iota {dimensions = array<i32: 1>} : vector<8x128xi32>
    %2 = vector.extract_strided_slice %0 {offsets = [0, 0], sizes = [8, 1], strides = [1, 1]} : vector<8x4xi32> to vector<8x1xi32>
    %3 = vector.broadcast %2 : vector<8x1xi32> to vector<8x128xi32>
    %4 = arith.cmpi eq, %1, %3 : vector<8x128xi32>
    %5 = vector.extract_strided_slice %0 {offsets = [0, 1], sizes = [8, 1], strides = [1, 1]} : vector<8x4xi32> to vector<8x1xi32>
    %c32_i32 = arith.constant 32 : i32
    %6 = vector.broadcast %c32_i32 : i32 to vector<8x1xi32>
    %7 = arith.addi %5, %6 : vector<8x1xi32>
    %8 = vector.broadcast %7 : vector<8x1xi32> to vector<8x128xi32>
    %9 = arith.cmpi eq, %1, %8 : vector<8x128xi32>
    %10 = arith.ori %4, %9 : vector<8x128xi1>
    %11 = vector.extract_strided_slice %0 {offsets = [0, 2], sizes = [8, 1], strides = [1, 1]} : vector<8x4xi32> to vector<8x1xi32>
    %c64_i32 = arith.constant 64 : i32
    %12 = vector.broadcast %c64_i32 : i32 to vector<8x1xi32>
    %13 = arith.addi %11, %12 : vector<8x1xi32>
    %14 = vector.broadcast %13 : vector<8x1xi32> to vector<8x128xi32>
    %15 = arith.cmpi eq, %1, %14 : vector<8x128xi32>
    %16 = arith.ori %10, %15 : vector<8x128xi1>
    %17 = vector.extract_strided_slice %0 {offsets = [0, 3], sizes = [8, 1], strides = [1, 1]} : vector<8x4xi32> to vector<8x1xi32>
    %c96_i32 = arith.constant 96 : i32
    %18 = vector.broadcast %c96_i32 : i32 to vector<8x1xi32>
    %19 = arith.addi %17, %18 : vector<8x1xi32>
    %20 = vector.broadcast %19 : vector<8x1xi32> to vector<8x128xi32>
    %21 = arith.cmpi eq, %1, %20 : vector<8x128xi32>
    %22 = arith.ori %16, %21 : vector<8x128xi1>
    %23 = arith.extui %22 : vector<8x128xi1> to vector<8x128xi32>
    %24 = arith.sitofp %23 : vector<8x128xi32> to vector<8x128xf32>
    %25 = arith.truncf %24 : vector<8x128xf32> to vector<8x128xbf16>
    %c0_1 = arith.constant 0 : index
    %c0_2 = arith.constant 0 : index
    %26 = vector.load %arg2[%c0_1, %c0_2] : memref<128x64xbf16, #tpu.memory_space<vmem>>, vector<128x64xbf16>
    %cst = arith.constant dense<0.000000e+00> : vector<8x64xf32>
    %27 = tpu.matmul %25, %26, %cst {dimension_numbers = #tpu.dot_dimension_numbers<[1], [0], [0], [1], [0, 0, 1, 1], [], []>} : vector<8x128xbf16>, vector<128x64xbf16>, vector<8x64xf32> -> vector<8x64xf32>
    %28 = arith.truncf %27 : vector<8x64xf32> to vector<8x64xbf16>
    %c0_3 = arith.constant 0 : index
    %c0_4 = arith.constant 0 : index
    %29 = vector.load %arg3[%c0_3, %c0_4] : memref<64x48xbf16, #tpu.memory_space<vmem>>, vector<64x48xbf16>
    %cst_5 = arith.constant dense<0.000000e+00> : vector<8x48xf32>
    %30 = tpu.matmul %28, %29, %cst_5 {dimension_numbers = #tpu.dot_dimension_numbers<[1], [0], [0], [1], [0, 0, 1, 1], [], []>} : vector<8x64xbf16>, vector<64x48xbf16>, vector<8x48xf32> -> vector<8x48xf32>
    %31 = vector.extract_strided_slice %30 {offsets = [0, 0], sizes = [8, 32], strides = [1, 1]} : vector<8x48xf32> to vector<8x32xf32>
    %c0_6 = arith.constant 0 : index
    %c0_7 = arith.constant 0 : index
    %32 = vector.load %arg6[%c0_6, %c0_7] : memref<1x49xf32, #tpu.memory_space<vmem>>, vector<1x32xf32>
    %33 = vector.broadcast %32 : vector<1x32xf32> to vector<8x32xf32>
    %34 = arith.addf %31, %33 : vector<8x32xf32>
    %cst_8 = arith.constant 0.000000e+00 : f32
    %35 = vector.broadcast %cst_8 : f32 to vector<8x32xf32>
    %36 = arith.maximumf %34, %35 : vector<8x32xf32>
    %37 = vector.extract_strided_slice %30 {offsets = [0, 32], sizes = [8, 16], strides = [1, 1]} : vector<8x48xf32> to vector<8x16xf32>
    %38 = arith.mulf %37, %37 : vector<8x16xf32>
    %cst_9 = arith.constant dense<0.000000e+00> : vector<8xf32>
    %39 = vector.multi_reduction <add>, %38, %cst_9 [1] : vector<8x16xf32> to vector<8xf32>
    %40 = vector.shape_cast %39 : vector<8xf32> to vector<8x1xf32>
    %41 = arith.mulf %27, %27 : vector<8x64xf32>
    %cst_10 = arith.constant dense<0.000000e+00> : vector<8xf32>
    %42 = vector.multi_reduction <add>, %41, %cst_10 [1] : vector<8x64xf32> to vector<8xf32>
    %43 = vector.shape_cast %42 : vector<8xf32> to vector<8x1xf32>
    %44 = arith.subf %40, %43 : vector<8x1xf32>
    %cst_11 = arith.constant 5.000000e-01 : f32
    %45 = vector.broadcast %cst_11 : f32 to vector<8x1xf32>
    %46 = arith.mulf %45, %44 : vector<8x1xf32>
    %47 = arith.truncf %36 : vector<8x32xf32> to vector<8x32xbf16>
    %c0_12 = arith.constant 0 : index
    %c0_13 = arith.constant 0 : index
    %48 = vector.load %arg4[%c0_12, %c0_13] : memref<32x16xbf16, #tpu.memory_space<vmem>>, vector<32x16xbf16>
    %cst_14 = arith.constant dense<0.000000e+00> : vector<8x16xf32>
    %49 = tpu.matmul %47, %48, %cst_14 {dimension_numbers = #tpu.dot_dimension_numbers<[1], [0], [0], [1], [0, 0, 1, 1], [], []>} : vector<8x32xbf16>, vector<32x16xbf16>, vector<8x16xf32> -> vector<8x16xf32>
    %c0_15 = arith.constant 0 : index
    %c32 = arith.constant 32 : index
    %50 = vector.load %arg6[%c0_15, %c32] : memref<1x49xf32, #tpu.memory_space<vmem>>, vector<1x16xf32>
    %51 = vector.broadcast %50 : vector<1x16xf32> to vector<8x16xf32>
    %52 = arith.addf %49, %51 : vector<8x16xf32>
    %cst_16 = arith.constant 0.000000e+00 : f32
    %53 = vector.broadcast %cst_16 : f32 to vector<8x16xf32>
    %54 = arith.maximumf %52, %53 : vector<8x16xf32>
    %c0_17 = arith.constant 0 : index
    %c0_18 = arith.constant 0 : index
    %55 = vector.load %arg5[%c0_17, %c0_18] : memref<1x16xf32, #tpu.memory_space<vmem>>, vector<1x16xf32>
    %56 = vector.broadcast %55 : vector<1x16xf32> to vector<8x16xf32>
    %57 = arith.mulf %54, %56 : vector<8x16xf32>
    %cst_19 = arith.constant dense<0.000000e+00> : vector<8xf32>
    %58 = vector.multi_reduction <add>, %57, %cst_19 [1] : vector<8x16xf32> to vector<8xf32>
    %59 = vector.shape_cast %58 : vector<8xf32> to vector<8x1xf32>
    %c0_20 = arith.constant 0 : index
    %c48 = arith.constant 48 : index
    %60 = vector.load %arg6[%c0_20, %c48] : memref<1x49xf32, #tpu.memory_space<vmem>>, vector<1x1xf32>
    %61 = vector.broadcast %60 : vector<1x1xf32> to vector<8x1xf32>
    %62 = arith.addf %59, %61 : vector<8x1xf32>
    %63 = arith.addf %62, %46 : vector<8x1xf32>
    %c0_21 = arith.constant 0 : index
    %c0_22 = arith.constant 0 : index
    %64 = vector.load %arg7[%c0_21, %c0_22] : memref<8x1xf32, #tpu.memory_space<vmem>>, vector<8x1xf32>
    tpu.vector_store %arg7[%c0_21, %c0_22], %63 {strides = array<i32>} : memref<8x1xf32, #tpu.memory_space<vmem>>, vector<8x1xf32>,
    return
  }
  func.func @transform_0(%arg0: i32) -> (i32, i32) {
    %c0_i32 = arith.constant 0 : i32
    %c0_i32_0 = arith.constant 0 : i32
    return %arg0, %c0_i32 : i32, i32
  }
  func.func @transform_1(%arg0: i32) -> (i32, i32) {
    %c0_i32 = arith.constant 0 : i32
    %c0_i32_0 = arith.constant 0 : i32
    %c0_i32_1 = arith.constant 0 : i32
    return %c0_i32, %c0_i32_0 : i32, i32
  }
  func.func @transform_2(%arg0: i32) -> (i32, i32) {
    %c0_i32 = arith.constant 0 : i32
    %c0_i32_0 = arith.constant 0 : i32
    %c0_i32_1 = arith.constant 0 : i32
    return %c0_i32, %c0_i32_0 : i32, i32
  }
  func.func @transform_3(%arg0: i32) -> (i32, i32) {
    %c0_i32 = arith.constant 0 : i32
    %c0_i32_0 = arith.constant 0 : i32
    %c0_i32_1 = arith.constant 0 : i32
    return %c0_i32, %c0_i32_0 : i32, i32
  }
  func.func @transform_4(%arg0: i32) -> (i32, i32) {
    %c0_i32 = arith.constant 0 : i32
    %c0_i32_0 = arith.constant 0 : i32
    %c0_i32_1 = arith.constant 0 : i32
    return %c0_i32, %c0_i32_0 : i32, i32
  }
  func.func @transform_5(%arg0: i32) -> (i32, i32) {
    %c0_i32 = arith.constant 0 : i32
    %c0_i32_0 = arith.constant 0 : i32
    %c0_i32_1 = arith.constant 0 : i32
    return %c0_i32, %c0_i32_0 : i32, i32
  }
  func.func @transform_6(%arg0: i32) -> (i32, i32) {
    %c0_i32 = arith.constant 0 : i32
    %c0_i32_0 = arith.constant 0 : i32
    return %arg0, %c0_i32 : i32, i32
  }
}

</mosaic_0001>

<llo_original>
// kernel: tpu_custom_call.1
$region0: #{tpu_custom_call.1}
  #allocation0 [shape = 'u32[]', space=smem, size = 0x4, offset = 0x4, fixed_abs, tag = 'smem constant byte address 0x4 - core index']
  #allocation1 [shape = 'u32[72,128]{1,0:T(1,128)}', space=vmem, size = 0x9000, scoped, tag = 'internal scratch']
  %s0 = inlined_call_operand.vmem [shape: s32[8,4], index: 0, kind: input, shape index: {}]
  %s1 = inlined_call_operand.vmem [shape: bf16[128,64], index: 1, kind: input, shape index: {}]
  %s2 = inlined_call_operand.vmem [shape: bf16[64,48], index: 2, kind: input, shape index: {}]
  %s3 = inlined_call_operand.vmem [shape: bf16[32,16], index: 3, kind: input, shape index: {}]
  %s4 = inlined_call_operand.vmem [shape: f32[1,16], index: 4, kind: input, shape index: {}]
  %s5 = inlined_call_operand.vmem [shape: f32[1,49], index: 5, kind: input, shape index: {}]
  %s6 = inlined_call_operand.hbm [shape: f32[1,8], index: 6, kind: output, shape index: {}]
  %s7 = sld [smem:[#allocation0]]
  $region34: #{tpu_custom_call.1} parent=0
    _
  %s9 = ssub.s32 1, %s7
  %s10 = scalar_select 0, %s9, %s7
  $region1: #{tpu_custom_call.1} parent=0
    #allocation2 [shape = 'u8[512]{0}', space=vmem, size = 0x400, scoped, tag = 'output window, operand 0, single buffered']
    #allocation3 [shape = 's32[1]{0}', space=sflag, size = 0x4, scoped, tag = 'scoped memory for tpu_custom_call.1']
    %11 = vsyncpa [#allocation3], 0
    // Predicated region
    $region2: #{tpu_custom_call.1} parent=1 // pred_check
      _
    $region3: #{tpu_custom_call.1} parent=1 // pred_check_branch
      %13 = sbr.rel (0) target = $region5
    $region4: #{tpu_custom_call.1} parent=1 // pred_region
      _
    $region5: #{tpu_custom_call.1} parent=1 // pred_fallthru
      _
    // Predicated region
    $region6: #{tpu_custom_call.1} parent=1 // pred_check
      _
    $region7: #{tpu_custom_call.1} parent=1 // pred_check_branch
      %15 = sbr.rel (0) target = $region9
    $region8: #{tpu_custom_call.1} parent=1 // pred_region
      _
    $region9: #{tpu_custom_call.1} parent=1 // pred_fallthru
      _
    // Predicated region
    $region10: #{tpu_custom_call.1} parent=1 // pred_check
      _
    $region11: #{tpu_custom_call.1} parent=1 // pred_check_branch
      %17 = sbr.rel (0) target = $region13
    $region12: #{tpu_custom_call.1} parent=1 // pred_region
      _
    $region13: #{tpu_custom_call.1} parent=1 // pred_fallthru
      _
    // Predicated region
    $region14: #{tpu_custom_call.1} parent=1 // pred_check
      _
    $region15: #{tpu_custom_call.1} parent=1 // pred_check_branch
      %19 = sbr.rel (0) target = $region17
    $region16: #{tpu_custom_call.1} parent=1 // pred_region
      _
    $region17: #{tpu_custom_call.1} parent=1 // pred_fallthru
      _
    // Predicated region
    $region18: #{tpu_custom_call.1} parent=1 // pred_check
      _
    $region19: #{tpu_custom_call.1} parent=1 // pred_check_branch
      %21 = sbr.rel (0) target = $region21
    $region20: #{tpu_custom_call.1} parent=1 // pred_region
      _
    $region21: #{tpu_custom_call.1} parent=1 // pred_fallthru
      _
    // Predicated region
    $region22: #{tpu_custom_call.1} parent=1 // pred_check
      _
    $region23: #{tpu_custom_call.1} parent=1 // pred_check_branch
      %23 = sbr.rel (0) target = $region25
    $region24: #{tpu_custom_call.1} parent=1 // pred_region
      _
    $region25: #{tpu_custom_call.1} parent=1 // pred_fallthru
      _
    %v25 = vld [vmem:[%s0] sm:$0xff]
    %v26 = vlaneseq
    %v27 = vand.u32 %v26, 127
    %28 = vset.pattern.permute.xlu0 0
    %29 = vperm.xlu0 %28, %v25
    %v30 = vpop.permute.xlu0 %29
    %vm31 = vcmp.eq.s32.totalorder %v27, %v30
    %v32 = vadd.s32 %v25, 32
    %33 = vset.pattern.permute.xlu0 1
    %34 = vperm.xlu0 %33, %v32
    %v35 = vpop.permute.xlu0 %34
    %vm36 = vcmp.eq.s32.totalorder %v27, %v35
    %vm37 = vmor %vm31, %vm36
    %v38 = vadd.s32 %v25, 64
    %39 = vset.pattern.permute.xlu0 2
    %40 = vperm.xlu0 %39, %v38
    %v41 = vpop.permute.xlu0 %40
    %vm42 = vcmp.eq.s32.totalorder %v27, %v41
    %vm43 = vmor %vm37, %vm42
    %v44 = vadd.s32 %v25, 96
    %45 = vset.pattern.permute.xlu0 3
    %46 = vperm.xlu0 %45, %v44
    %v47 = vpop.permute.xlu0 %46
    %vm48 = vcmp.eq.s32.totalorder %v27, %v47
    %vm49 = vmor %vm43, %vm48
    %v50 = vsel %vm49, 1, 0
    %v51 = vcvt.s32.f32 %v50
    %v52 = vpack.c.bf16 %v51, %v51
    %v53 = vld [vmem:[%s1] sm:$0xf]
    %v54 = vld [vmem:[%s1 + $0x4] sm:$0xf]
    %v55 = vld [vmem:[%s1 + $0x8] sm:$0xf]
    %v56 = vld [vmem:[%s1 + $0xc] sm:$0xf]
    %v57 = vld [vmem:[%s1 + $0x10] sm:$0xf]
    %v58 = vld [vmem:[%s1 + $0x14] sm:$0xf]
    %v59 = vld [vmem:[%s1 + $0x18] sm:$0xf]
    %v60 = vld [vmem:[%s1 + $0x1c] sm:$0xf]
    %v61 = vld [vmem:[%s1 + $0x20] sm:$0xf]
    %v62 = vld [vmem:[%s1 + $0x24] sm:$0xf]
    %v63 = vld [vmem:[%s1 + $0x28] sm:$0xf]
    %v64 = vld [vmem:[%s1 + $0x2c] sm:$0xf]
    %v65 = vld [vmem:[%s1 + $0x30] sm:$0xf]
    %v66 = vld [vmem:[%s1 + $0x34] sm:$0xf]
    %v67 = vld [vmem:[%s1 + $0x38] sm:$0xf]
    %v68 = vld [vmem:[%s1 + $0x3c] sm:$0xf]
    %v85 = vunpack.c.l.b16 %v53
    %v86 = vunpack.c.l.b16 %v54
    %v87 = vunpack.c.l.b16 %v55
    %v88 = vunpack.c.l.b16 %v56
    %v89 = vunpack.c.l.b16 %v57
    %v90 = vunpack.c.l.b16 %v58
    %v91 = vunpack.c.l.b16 %v59
    %v92 = vunpack.c.l.b16 %v60
    %v93 = vunpack.c.l.b16 %v61
    %v94 = vunpack.c.l.b16 %v62
    %v95 = vunpack.c.l.b16 %v63
    %v96 = vunpack.c.l.b16 %v64
    %v97 = vunpack.c.l.b16 %v65
    %v98 = vunpack.c.l.b16 %v66
    %v99 = vunpack.c.l.b16 %v67
    %v100 = vunpack.c.l.b16 %v68
    %v101 = vpack.c.b16 %v86, %v85
    %v102 = vpack.c.b16 %v88, %v87
    %v103 = vpack.c.b16 %v90, %v89
    %v104 = vpack.c.b16 %v92, %v91
    %v105 = vpack.c.b16 %v94, %v93
    %v106 = vpack.c.b16 %v96, %v95
    %v107 = vpack.c.b16 %v98, %v97
    %v108 = vpack.c.b16 %v100, %v99
    %117 = vmatpush.bf16.msra.mxu0 %v108
    %118 = vmatpush.bf16.msra.mxu0 %v107
    %119 = vmatpush.bf16.msra.mxu0 %v106
    %120 = vmatpush.bf16.msra.mxu0 %v105
    %121 = vmatpush.bf16.msra.mxu0 %v104
    %122 = vmatpush.bf16.msra.mxu0 %v103
    %123 = vmatpush.bf16.msra.mxu0 %v102
    %124 = vmatpush.bf16.msra.mxu0 %v101
    %125 = vmatmul.bf16.gmra.mxu0 %v52
    %v126 = vpop.f32.mrf.mxu0
    %v127 = vadd.f32 0.0, %v126
    %v128 = vpop.f32.mrf.mxu0
    %129 = vdwg.mxu0
    %v130 = vpack.c.bf16 %v127, %v127
    %v131 = vld [vmem:[%s2] sm:$0xf]
    %v132 = vld [vmem:[%s2 + $0x4] sm:$0xf]
    %v133 = vld [vmem:[%s2 + $0x8] sm:$0xf]
    %v134 = vld [vmem:[%s2 + $0xc] sm:$0xf]
    %v135 = vld [vmem:[%s2 + $0x10] sm:$0xf]
    %v136 = vld [vmem:[%s2 + $0x14] sm:$0xf]
    %v137 = vld [vmem:[%s2 + $0x18] sm:$0xf]
    %v138 = vld [vmem:[%s2 + $0x1c] sm:$0xf]
    %v147 = vunpack.c.l.b16 %v131
    %v148 = vunpack.c.l.b16 %v132
    %v149 = vunpack.c.l.b16 %v133
    %v150 = vunpack.c.l.b16 %v134
    %v151 = vunpack.c.l.b16 %v135
    %v152 = vunpack.c.l.b16 %v136
    %v153 = vunpack.c.l.b16 %v137
    %v154 = vunpack.c.l.b16 %v138
    %v155 = vpack.c.b16 %v148, %v147
    %v156 = vpack.c.b16 %v150, %v149
    %v157 = vpack.c.b16 %v152, %v151
    %v158 = vpack.c.b16 %v154, %v153
    %vm163 = vcmask 523264
    %v165 = vsel %vm163, %v130, 0
    %167 = vmatpush.bf16.msra.mxu0 0
    %168 = vmatpush.bf16.msra.mxu0 0
    %169 = vmatpush.bf16.msra.mxu0 0
    %170 = vmatpush.bf16.msra.mxu0 0
    %171 = vmatpush.bf16.msra.mxu0 %v158
    %172 = vmatpush.bf16.msra.mxu0 %v157
    %173 = vmatpush.bf16.msra.mxu0 %v156
    %174 = vmatpush.bf16.msra.mxu0 %v155
    %175 = vmatmul.bf16.gmra.mxu0 %v165
    %v176 = vpop.f32.mrf.mxu0
    %v177 = vadd.f32 0.0, %v176
    %v178 = vpop.f32.mrf.mxu0
    %179 = vdwg.mxu0
    %v180 = vld [vmem:[%s5] sm:$0x1]
    %v182 = vperm.slane %v180, 0
    %v184 = vadd.f32 %v177, %v182
    %v185 = vmax.f32 %v184, 0.0
    %v186 = vmul.f32 %v177, %v177
    %188 = vrot.lane.b32.xlu0 %v186, 96
    %v189 = vpop.permute.xlu0 %188
    %vm191 = vcmask 130048
    %v192 = vsel %vm191, %v189, 0.0
    %193 = vadd.xlane.f32.xlu0 %v192
    %v194 = vpop.xlane.xlu0 %193
    %v195 = vmul.f32 %v127, %v127
    %v196 = vsel %vm163, %v195, 0.0
    %197 = vadd.xlane.f32.xlu0 %v196
    %v198 = vpop.xlane.xlu0 %197
    %v199 = vsub.f32 %v194, %v198
    %v200 = vmul.f32 %v199, 0.5
    %v201 = vpack.c.bf16 %v185, %v185
    %v202 = vld [vmem:[%s3] sm:$0xf]
    %v203 = vld [vmem:[%s3 + $0x4] sm:$0xf]
    %v204 = vld [vmem:[%s3 + $0x8] sm:$0xf]
    %v205 = vld [vmem:[%s3 + $0xc] sm:$0xf]
    %v210 = vunpack.c.l.b16 %v202
    %v211 = vunpack.c.l.b16 %v203
    %v212 = vunpack.c.l.b16 %v204
    %v213 = vunpack.c.l.b16 %v205
    %v214 = vpack.c.b16 %v211, %v210
    %v215 = vpack.c.b16 %v213, %v212
    %218 = vrot.lane.b32.xlu0 %v182, 96
    %v219 = vpop.permute.xlu0 %218
    %vm221 = vcmask 261120
    %v223 = vsel %vm221, %v201, 0
    %225 = vmatpush.bf16.msra.mxu0 0
    %226 = vmatpush.bf16.msra.mxu0 0
    %227 = vmatpush.bf16.msra.mxu0 0
    %228 = vmatpush.bf16.msra.mxu0 0
    %229 = vmatpush.bf16.msra.mxu0 0
    %230 = vmatpush.bf16.msra.mxu0 0
    %231 = vmatpush.bf16.msra.mxu0 %v215
    %232 = vmatpush.bf16.msra.mxu0 %v214
    %233 = vmatmul.bf16.gmra.mxu0 %v223
    %v234 = vpop.f32.mrf.mxu0
    %v235 = vadd.f32 %v219, %v234
    %v236 = vpop.f32.mrf.mxu0
    %237 = vdwg.mxu0
    %v238 = vmax.f32 %v235, 0.0
    %v239 = vld [vmem:[%s4] sm:$0x1]
    %v241 = vperm.slane %v239, 0
    %v243 = vmul.f32 %v238, %v241
    %v244 = vsel %vm191, %v243, 0.0
    %245 = vadd.xlane.f32.xlu0 %v244
    %v246 = vpop.xlane.xlu0 %245
    %v247 = vadd.f32 %v246, %v182
    %v248 = vadd.f32 %v247, %v200
    %250 = vset.pattern.permute.xlu0 48
    %251 = vperm.xlu0 %250, %v248
    %v252 = vpop.permute.xlu0 %251
    %v253 = vperm.slane %v252, %v27
    %vm255 = vcmask 57344
    %256 = vst.msk [vmem:[#allocation2] sm:$0x1] %vm255, %v253
    // Predicated region
    $region26: #{tpu_custom_call.1} parent=1 // pred_check
      _
    $region27: #{tpu_custom_call.1} parent=1 // pred_check_branch
      %258 = sbr.rel (0) target = $region29
    $region28: #{tpu_custom_call.1} parent=1 // pred_region
      %260 = vsyncadd [#allocation3], 0
      %s262 = sshll.u32 [#allocation2], 4
      %s263 = int_to_ptr.vmem [resolvable:$true] %s262
      %s264 = sshll.u32 %s6, 4
      %s265 = int_to_ptr.hbm [resolvable:$true] %s264
      %267 = dma.vmem_to_hbm [thread:$0]  %s263, 16, %s265, [#allocation3]
    $region29: #{tpu_custom_call.1} parent=1 // pred_fallthru
      _
    // Predicated region
    $region30: #{tpu_custom_call.1} parent=1 // pred_check
      _
    $region31: #{tpu_custom_call.1} parent=1 // pred_check_branch
      %269 = sbr.rel (0) target = $region33
    $region32: #{tpu_custom_call.1} parent=1 // pred_region
      %271 = dma.done [#allocation3], 16
    $region33: #{tpu_custom_call.1} parent=1 // pred_fallthru
      _
    %272 = vsyncpa [#allocation3], 1

// kernel: tpu_custom_call.1
$region0: #{tpu_custom_call.1}
  #allocation0 [shape = 'u32[]', space=smem, size = 0x4, offset = 0x4, fixed_abs, tag = 'smem constant byte address 0x4 - core index']
  #allocation1 [shape = 'u32[72,128]{1,0:T(1,128)}', space=vmem, size = 0x9000, scoped, tag = 'internal scratch']
  %s0 = inlined_call_operand.vmem [shape: s32[8,4], index: 0, kind: input, shape index: {}]
  %s1 = inlined_call_operand.vmem [shape: bf16[128,64], index: 1, kind: input, shape index: {}]
  %s2 = inlined_call_operand.vmem [shape: bf16[64,48], index: 2, kind: input, shape index: {}]
  %s3 = inlined_call_operand.vmem [shape: bf16[32,16], index: 3, kind: input, shape index: {}]
  %s4 = inlined_call_operand.vmem [shape: f32[1,16], index: 4, kind: input, shape index: {}]
  %s5 = inlined_call_operand.vmem [shape: f32[1,49], index: 5, kind: input, shape index: {}]
  %s6 = inlined_call_operand.vmem [shape: f32[8,1], index: 6, kind: output, shape index: {}]
  %s7 = sld [smem:[#allocation0]]
  $region34: #{tpu_custom_call.1} parent=0
    _
  %s9 = ssub.s32 1, %s7
  %s10 = scalar_select 0, %s9, %s7
  // Predicated region
  $region2: #{tpu_custom_call.1} parent=0 // pred_check
    _
  $region3: #{tpu_custom_call.1} parent=0 // pred_check_branch
    %12 = sbr.rel (0) target = $region5
  $region4: #{tpu_custom_call.1} parent=0 // pred_region
    _
  $region5: #{tpu_custom_call.1} parent=0 // pred_fallthru
    _
  // Predicated region
  $region6: #{tpu_custom_call.1} parent=0 // pred_check
    _
  $region7: #{tpu_custom_call.1} parent=0 // pred_check_branch
    %14 = sbr.rel (0) target = $region9
  $region8: #{tpu_custom_call.1} parent=0 // pred_region
    _
  $region9: #{tpu_custom_call.1} parent=0 // pred_fallthru
    _
  // Predicated region
  $region10: #{tpu_custom_call.1} parent=0 // pred_check
    _
  $region11: #{tpu_custom_call.1} parent=0 // pred_check_branch
    %16 = sbr.rel (0) target = $region13
  $region12: #{tpu_custom_call.1} parent=0 // pred_region
    _
  $region13: #{tpu_custom_call.1} parent=0 // pred_fallthru
    _
  // Predicated region
  $region14: #{tpu_custom_call.1} parent=0 // pred_check
    _
  $region15: #{tpu_custom_call.1} parent=0 // pred_check_branch
    %18 = sbr.rel (0) target = $region17
  $region16: #{tpu_custom_call.1} parent=0 // pred_region
    _
  $region17: #{tpu_custom_call.1} parent=0 // pred_fallthru
    _
  // Predicated region
  $region18: #{tpu_custom_call.1} parent=0 // pred_check
    _
  $region19: #{tpu_custom_call.1} parent=0 // pred_check_branch
    %20 = sbr.rel (0) target = $region21
  $region20: #{tpu_custom_call.1} parent=0 // pred_region
    _
  $region21: #{tpu_custom_call.1} parent=0 // pred_fallthru
    _
  // Predicated region
  $region22: #{tpu_custom_call.1} parent=0 // pred_check
    _
  $region23: #{tpu_custom_call.1} parent=0 // pred_check_branch
    %22 = sbr.rel (0) target = $region25
  $region24: #{tpu_custom_call.1} parent=0 // pred_region
    _
  $region25: #{tpu_custom_call.1} parent=0 // pred_fallthru
    _
  %v24 = vld [vmem:[%s0] sm:$0xff]
  %v25 = vlaneseq
  %v26 = vand.u32 %v25, 127
  %27 = vset.pattern.permute.xlu0 0
  %28 = vperm.xlu0 %27, %v24
  %v29 = vpop.permute.xlu0 %28
  %vm30 = vcmp.eq.s32.totalorder %v26, %v29
  %v31 = vadd.s32 %v24, 32
  %32 = vset.pattern.permute.xlu0 1
  %33 = vperm.xlu0 %32, %v31
  %v34 = vpop.permute.xlu0 %33
  %vm35 = vcmp.eq.s32.totalorder %v26, %v34
  %vm36 = vmor %vm30, %vm35
  %v37 = vadd.s32 %v24, 64
  %38 = vset.pattern.permute.xlu0 2
  %39 = vperm.xlu0 %38, %v37
  %v40 = vpop.permute.xlu0 %39
  %vm41 = vcmp.eq.s32.totalorder %v26, %v40
  %vm42 = vmor %vm36, %vm41
  %v43 = vadd.s32 %v24, 96
  %44 = vset.pattern.permute.xlu0 3
  %45 = vperm.xlu0 %44, %v43
  %v46 = vpop.permute.xlu0 %45
  %vm47 = vcmp.eq.s32.totalorder %v26, %v46
  %vm48 = vmor %vm42, %vm47
  %v49 = vsel %vm48, 1, 0
  %v50 = vcvt.s32.f32 %v49
  %v51 = vpack.c.bf16 %v50, %v50
  %v52 = vld [vmem:[%s1] sm:$0xf]
  %v53 = vld [vmem:[%s1 + $0x4] sm:$0xf]
  %v54 = vld [vmem:[%s1 + $0x8] sm:$0xf]
  %v55 = vld [vmem:[%s1 + $0xc] sm:$0xf]
  %v56 = vld [vmem:[%s1 + $0x10] sm:$0xf]
  %v57 = vld [vmem:[%s1 + $0x14] sm:$0xf]
  %v58 = vld [vmem:[%s1 + $0x18] sm:$0xf]
  %v59 = vld [vmem:[%s1 + $0x1c] sm:$0xf]
  %v60 = vld [vmem:[%s1 + $0x20] sm:$0xf]
  %v61 = vld [vmem:[%s1 + $0x24] sm:$0xf]
  %v62 = vld [vmem:[%s1 + $0x28] sm:$0xf]
  %v63 = vld [vmem:[%s1 + $0x2c] sm:$0xf]
  %v64 = vld [vmem:[%s1 + $0x30] sm:$0xf]
  %v65 = vld [vmem:[%s1 + $0x34] sm:$0xf]
  %v66 = vld [vmem:[%s1 + $0x38] sm:$0xf]
  %v67 = vld [vmem:[%s1 + $0x3c] sm:$0xf]
  %v84 = vunpack.c.l.b16 %v52
  %v85 = vunpack.c.l.b16 %v53
  %v86 = vunpack.c.l.b16 %v54
  %v87 = vunpack.c.l.b16 %v55
  %v88 = vunpack.c.l.b16 %v56
  %v89 = vunpack.c.l.b16 %v57
  %v90 = vunpack.c.l.b16 %v58
  %v91 = vunpack.c.l.b16 %v59
  %v92 = vunpack.c.l.b16 %v60
  %v93 = vunpack.c.l.b16 %v61
  %v94 = vunpack.c.l.b16 %v62
  %v95 = vunpack.c.l.b16 %v63
  %v96 = vunpack.c.l.b16 %v64
  %v97 = vunpack.c.l.b16 %v65
  %v98 = vunpack.c.l.b16 %v66
  %v99 = vunpack.c.l.b16 %v67
  %v100 = vpack.c.b16 %v85, %v84
  %v101 = vpack.c.b16 %v87, %v86
  %v102 = vpack.c.b16 %v89, %v88
  %v103 = vpack.c.b16 %v91, %v90
  %v104 = vpack.c.b16 %v93, %v92
  %v105 = vpack.c.b16 %v95, %v94
  %v106 = vpack.c.b16 %v97, %v96
  %v107 = vpack.c.b16 %v99, %v98
  %116 = vmatpush.bf16.msra.mxu0 %v107
  %117 = vmatpush.bf16.msra.mxu0 %v106
  %118 = vmatpush.bf16.msra.mxu0 %v105
  %119 = vmatpush.bf16.msra.mxu0 %v104
  %120 = vmatpush.bf16.msra.mxu0 %v103
  %121 = vmatpush.bf16.msra.mxu0 %v102
  %122 = vmatpush.bf16.msra.mxu0 %v101
  %123 = vmatpush.bf16.msra.mxu0 %v100
  %124 = vmatmul.bf16.gmra.mxu0 %v51
  %v125 = vpop.f32.mrf.mxu0
  %v126 = vadd.f32 0.0, %v125
  %v127 = vpop.f32.mrf.mxu0
  %128 = vdwg.mxu0
  %v129 = vpack.c.bf16 %v126, %v126
  %v130 = vld [vmem:[%s2] sm:$0xf]
  %v131 = vld [vmem:[%s2 + $0x4] sm:$0xf]
  %v132 = vld [vmem:[%s2 + $0x8] sm:$0xf]
  %v133 = vld [vmem:[%s2 + $0xc] sm:$0xf]
  %v134 = vld [vmem:[%s2 + $0x10] sm:$0xf]
  %v135 = vld [vmem:[%s2 + $0x14] sm:$0xf]
  %v136 = vld [vmem:[%s2 + $0x18] sm:$0xf]
  %v137 = vld [vmem:[%s2 + $0x1c] sm:$0xf]
  %v146 = vunpack.c.l.b16 %v130
  %v147 = vunpack.c.l.b16 %v131
  %v148 = vunpack.c.l.b16 %v132
  %v149 = vunpack.c.l.b16 %v133
  %v150 = vunpack.c.l.b16 %v134
  %v151 = vunpack.c.l.b16 %v135
  %v152 = vunpack.c.l.b16 %v136
  %v153 = vunpack.c.l.b16 %v137
  %v154 = vpack.c.b16 %v147, %v146
  %v155 = vpack.c.b16 %v149, %v148
  %v156 = vpack.c.b16 %v151, %v150
  %v157 = vpack.c.b16 %v153, %v152
  %vm162 = vcmask 523264
  %v164 = vsel %vm162, %v129, 0
  %166 = vmatpush.bf16.msra.mxu0 0
  %167 = vmatpush.bf16.msra.mxu0 0
  %168 = vmatpush.bf16.msra.mxu0 0
  %169 = vmatpush.bf16.msra.mxu0 0
  %170 = vmatpush.bf16.msra.mxu0 %v157
  %171 = vmatpush.bf16.msra.mxu0 %v156
  %172 = vmatpush.bf16.msra.mxu0 %v155
  %173 = vmatpush.bf16.msra.mxu0 %v154
  %174 = vmatmul.bf16.gmra.mxu0 %v164
  %v175 = vpop.f32.mrf.mxu0
  %v176 = vadd.f32 0.0, %v175
  %v177 = vpop.f32.mrf.mxu0
  %178 = vdwg.mxu0
  %v179 = vld [vmem:[%s5] sm:$0x1]
  %v181 = vperm.slane %v179, 0
  %v183 = vadd.f32 %v176, %v181
  %v184 = vmax.f32 %v183, 0.0
  %v185 = vmul.f32 %v176, %v176
  %187 = vrot.lane.b32.xlu0 %v185, 96
  %v188 = vpop.permute.xlu0 %187
  %vm190 = vcmask 130048
  %v191 = vsel %vm190, %v188, 0.0
  %192 = vadd.xlane.f32.xlu0 %v191
  %v193 = vpop.xlane.xlu0 %192
  %v194 = vmul.f32 %v126, %v126
  %v195 = vsel %vm162, %v194, 0.0
  %196 = vadd.xlane.f32.xlu0 %v195
  %v197 = vpop.xlane.xlu0 %196
  %v198 = vsub.f32 %v193, %v197
  %v199 = vmul.f32 %v198, 0.5
  %v200 = vpack.c.bf16 %v184, %v184
  %v201 = vld [vmem:[%s3] sm:$0xf]
  %v202 = vld [vmem:[%s3 + $0x4] sm:$0xf]
  %v203 = vld [vmem:[%s3 + $0x8] sm:$0xf]
  %v204 = vld [vmem:[%s3 + $0xc] sm:$0xf]
  %v209 = vunpack.c.l.b16 %v201
  %v210 = vunpack.c.l.b16 %v202
  %v211 = vunpack.c.l.b16 %v203
  %v212 = vunpack.c.l.b16 %v204
  %v213 = vpack.c.b16 %v210, %v209
  %v214 = vpack.c.b16 %v212, %v211
  %217 = vrot.lane.b32.xlu0 %v181, 96
  %v218 = vpop.permute.xlu0 %217
  %vm220 = vcmask 261120
  %v222 = vsel %vm220, %v200, 0
  %224 = vmatpush.bf16.msra.mxu0 0
  %225 = vmatpush.bf16.msra.mxu0 0
  %226 = vmatpush.bf16.msra.mxu0 0
  %227 = vmatpush.bf16.msra.mxu0 0
  %228 = vmatpush.bf16.msra.mxu0 0
  %229 = vmatpush.bf16.msra.mxu0 0
  %230 = vmatpush.bf16.msra.mxu0 %v214
  %231 = vmatpush.bf16.msra.mxu0 %v213
  %232 = vmatmul.bf16.gmra.mxu0 %v222
  %v233 = vpop.f32.mrf.mxu0
  %v234 = vadd.f32 %v218, %v233
  %v235 = vpop.f32.mrf.mxu0
  %236 = vdwg.mxu0
  %v237 = vmax.f32 %v234, 0.0
  %v238 = vld [vmem:[%s4] sm:$0x1]
  %v240 = vperm.slane %v238, 0
  %v242 = vmul.f32 %v237, %v240
  %v243 = vsel %vm190, %v242, 0.0
  %244 = vadd.xlane.f32.xlu0 %v243
  %v245 = vpop.xlane.xlu0 %244
  %v246 = vadd.f32 %v245, %v181
  %v247 = vadd.f32 %v246, %v199
  %249 = vrot.lane.b32.xlu0 %v247, 80
  %v250 = vpop.permute.xlu0 %249
  %vm252 = vcmask 7168
  %253 = vst.msk [vmem:[%s6] sm:$0xff] %vm252, %v250
  // Predicated region
  $region26: #{tpu_custom_call.1} parent=0 // pred_check
    _
  $region27: #{tpu_custom_call.1} parent=0 // pred_check_branch
    %255 = sbr.rel (0) target = $region29
  $region28: #{tpu_custom_call.1} parent=0 // pred_region
    _
  $region29: #{tpu_custom_call.1} parent=0 // pred_fallthru
    _
  // Predicated region
  $region30: #{tpu_custom_call.1} parent=0 // pred_check
    _
  $region31: #{tpu_custom_call.1} parent=0 // pred_check_branch
    %257 = sbr.rel (0) target = $region33
  $region32: #{tpu_custom_call.1} parent=0 // pred_region
    _
  $region33: #{tpu_custom_call.1} parent=0 // pred_fallthru
    _

</llo_original>
